<compile_context>
chip_gen: v6e
topology: v6e:2x2x1
jax: 0.10.0
libtpu: 0.0.40
codegen_flags: <defaults>
</compile_context>

<pallas_src>
import jax
import jax.numpy as jnp
from jax.experimental import pallas as pl
from jax.experimental.pallas import tpu as pltpu


def _blockwise_softmax(s, split):
    """Independent softmax over columns [:split] and [split:] of the last axis.

    Implemented with a column mask (no lane slicing, no concat), so the caller
    can store the result with a single full-width, lane-dense write.
    """
    col = jax.lax.broadcasted_iota(jnp.int32, s.shape, s.ndim - 1)
    left = col < split
    m_left = jnp.max(jnp.where(left, s, -1e30), axis=-1, keepdims=True)
    m_right = jnp.max(jnp.where(left, -1e30, s), axis=-1, keepdims=True)
    m = jnp.where(left, m_left, m_right)
    e = jnp.exp(s - m)  # f32 exp kept for v5e portability (no bf16 EUP there)
    d_left = jnp.sum(jnp.where(left, e, 0.0), axis=-1, keepdims=True)
    d_right = jnp.sum(jnp.where(left, 0.0, e), axis=-1, keepdims=True)
    inv = jnp.where(left,
                    pl.reciprocal(d_left, approx=True),
                    pl.reciprocal(d_right, approx=True))
    return e * inv


def _fusion_kernel(a_ref, b_ref, w_ref, bias_ref, out_ref):
    # a_ref: (Bt, SA, E) f32      b_ref: (Bt, SB, E) f32
    # w_ref: (4, E, E) bf16, pre-transposed = [WqA^T*scale, WkA^T, WqB^T*scale, WkB^T]
    # bias_ref: (4, 1, E) f32 = [bqA*scale, bkA, bqB*scale, bkB]
    # out_ref: (Bt, SA+SB, SA+SB) f32
    Bt, sa, E = a_ref.shape
    sb = b_ref.shape[1]

    # bf16 activations into the MXU, f32 accumulation.
    a2d = a_ref[...].reshape(Bt * sa, E).astype(jnp.bfloat16)
    b2d = b_ref[...].reshape(Bt * sb, E).astype(jnp.bfloat16)

    # Unfused per-matrix projections -> no mid-tile column slicing afterwards.
    # (The 1/(H*sqrt(E)) softmax scale is already folded into the Q weights
    # and Q biases on the host, so the scores below come out pre-scaled.)
    def proj(x2d, w, b):
        return jnp.dot(x2d, w, preferred_element_type=jnp.float32) + b

    qA = proj(a2d, w_ref[0], bias_ref[0]).reshape(Bt, sa, E).astype(jnp.bfloat16)
    kA = proj(a2d, w_ref[1], bias_ref[1]).reshape(Bt, sa, E).astype(jnp.bfloat16)
    qB = proj(b2d, w_ref[2], bias_ref[2]).reshape(Bt, sb, E).astype(jnp.bfloat16)
    kB = proj(b2d, w_ref[3], bias_ref[3]).reshape(Bt, sb, E).astype(jnp.bfloat16)

    # One full-width score matmul per query modality (2 MXU pushes, not 4),
    # keys pre-ordered to match the output column layout of each row block.
    k_rows_a = jnp.concatenate([kA, kB], axis=1)  # A rows: columns [kA | kB]
    k_rows_b = jnp.concatenate([kB, kA], axis=1)  # B rows: columns [kB | kA]

    s_a = jnp.einsum('bqe,bke->bqk', qA, k_rows_a,
                     preferred_element_type=jnp.float32)  # (Bt, SA, S)
    s_b = jnp.einsum('bqe,bke->bqk', qB, k_rows_b,
                     preferred_element_type=jnp.float32)  # (Bt, SB, S)

    # torch.cat ordering:
    #   rows 0..SA-1     : [ softmax(qA,kA) | softmax(qA,kB) ]   (split at SA)
    #   rows SA..SA+SB-1 : [ softmax(qB,kB) | softmax(qB,kA) ]   (split at SB)
    # Two lane-dense full-width stores (was four masked sub-width stores).
    out_ref[:, :sa, :] = _blockwise_softmax(s_a, sa)
    out_ref[:, sa:, :] = _blockwise_softmax(s_b, sb)


def _pick_block_batch(N, seq_a, seq_b, embed_dim, *, vmem_budget_bytes):
    """Largest divisor of N whose per-step VMEM fits the budget, keeping
    at least 2 grid steps (when N >= 2) so both v7x TensorCores get work."""
    E = embed_dim
    S = seq_a + seq_b
    # Constant blocks (bf16 weights + f32 bias), double-buffered by default.
    const_bytes = 2 * (4 * E * E * 2 + 4 * E * 4)
    per_elem = (
        2 * 4 * (seq_a * E + seq_b * E)   # double-buffered f32 input blocks
        + 2 * 4 * S * S                   # double-buffered f32 output block
        + 4 * 2 * S * E                   # bf16 q/k projections + reordered K
        + 4 * 4 * S * S                   # f32 scores + softmax temporaries
    )
    budget = max(vmem_budget_bytes - const_bytes, per_elem)
    cap = max(budget // per_elem, 1)
    best = 1
    for bt in range(1, N + 1):
        if N % bt != 0 or bt > cap:
            continue
        if N >= 2 and N // bt < 2:
            continue  # keep grid >= 2 for the "parallel" axis (v7x megacore)
        best = bt
    return best


def multimodal_attention_fusion(modalA, modalB, params, *, num_heads,
                                block_batch=None,
                                vmem_budget_bytes=36 * 1024 * 1024,
                                single_buffer_constants=False):
    """params: dict with wq_a, bq_a, wk_a, bk_a, wq_b, bq_b, wk_b, bk_b.
    Weights are (E, E) nn.Linear layout (out_features, in_features);
    biases are (1, E)."""
    N, SA, E = modalA.shape
    _, SB, _ = modalB.shape
    S = SA + SB

    Bt = (block_batch if block_batch is not None
          else _pick_block_batch(N, SA, SB, E,
                                 vmem_budget_bytes=vmem_budget_bytes))
    assert N % Bt == 0, "block_batch must divide N"

    # Host-side packing: pre-transposed weights (kernel does x @ W, zero
    # in-kernel transposes), softmax scale folded into the Q weights AND the
    # Q biases, weights cast to bf16 (MXU-native, half the constant DMA).
    scale = 1.0 / (num_heads * (E ** 0.5))
    w_packed = jnp.stack([
        params["wq_a"].T * scale,
        params["wk_a"].T,
        params["wq_b"].T * scale,
        params["wk_b"].T,
    ]).astype(jnp.bfloat16)                                  # (4, E, E)
    b_packed = jnp.stack([
        params["bq_a"] * scale,
        params["bk_a"],
        params["bq_b"] * scale,
        params["bk_b"],
    ]).astype(jnp.float32)                                   # (4, 1, E)

    # For very large E on v7x, single-buffer the constant blocks so their
    # (never-changing) second pipeline buffer doesn't eat VMEM.
    const_kwargs = (dict(pipeline_mode=pl.Buffered(1))
                    if single_buffer_constants else {})

    return pl.pallas_call(
        _fusion_kernel,
        out_shape=jax.ShapeDtypeStruct((N, S, S), jnp.float32),
        grid_spec=pltpu.PrefetchScalarGridSpec(
            num_scalar_prefetch=0,
            grid=(N // Bt,),
            in_specs=[
                pl.BlockSpec((Bt, SA, E), lambda n: (n, 0, 0)),      # modalA
                pl.BlockSpec((Bt, SB, E), lambda n: (n, 0, 0)),      # modalB
                pl.BlockSpec((4, E, E), lambda n: (0, 0, 0),
                             **const_kwargs),                        # weights
                pl.BlockSpec((4, 1, E), lambda n: (0, 0, 0),
                             **const_kwargs),                        # biases
            ],
            out_specs=pl.BlockSpec((Bt, S, S), lambda n: (n, 0, 0)),
        ),
        compiler_params=pltpu.CompilerParams(
            # parallel batch axis -> shardable across v7x's two TensorCores
            dimension_semantics=("parallel",),
            # safe on every generation; actual use is bounded by the Bt budget
            vmem_limit_bytes=48 * 1024 * 1024,
        ),
    )(modalA, modalB, w_packed, b_packed)


def _reference(modalA, modalB, params, *, num_heads):
    """Pure-JAX reference mirroring the PyTorch forward."""
    N, SA, E = modalA.shape
    _, SB, _ = modalB.shape
    H, D = num_heads, E // num_heads

    def lin(x, w, b):
        return x @ w.T + b[0]

    qA = lin(modalA, params["wq_a"], params["bq_a"]).reshape(N, SA, H, D)
    kA = lin(modalA, params["wk_a"], params["bk_a"]).reshape(N, SA, H, D)
    qB = lin(modalB, params["wq_b"], params["bq_b"]).reshape(N, SB, H, D)
    kB = lin(modalB, params["wk_b"], params["bk_b"]).reshape(N, SB, H, D)

    def attn(q, k):
        s = jnp.einsum("nqhd,nkhd->nhqk", q, k).mean(axis=1)
        return jax.nn.softmax(s / (E ** 0.5), axis=-1)

    wA, wB = attn(qA, kA), attn(qB, kB)
    wAB, wBA = attn(qA, kB), attn(qB, kA)
    cat_upper = jnp.concatenate([wB, wBA], axis=-1)
    cat_lower = jnp.concatenate([wA, wAB], axis=-1)
    return jnp.concatenate([cat_lower, cat_upper], axis=1)


if __name__ == "__main__":
    # Small shapes: N=2, seq_A=8, seq_B=8, embed_dim=32, num_heads=4
    N, SA, SB, E, H = 2, 8, 8, 32, 4

    key = jax.random.PRNGKey(0)
    keys = jax.random.split(key, 10)

    modalA = jax.random.normal(keys[0], (N, SA, E), dtype=jnp.float32)
    modalB = jax.random.normal(keys[1], (N, SB, E), dtype=jnp.float32)

    def init_linear(kw, kb):
        # deterministic stand-in for nn.Linear default init
        bound = 1.0 / (E ** 0.5)
        w = jax.random.uniform(kw, (E, E), jnp.float32, -bound, bound)
        b = jax.random.uniform(kb, (1, E), jnp.float32, -bound, bound)
        return w, b

    wq_a, bq_a = init_linear(keys[2], keys[3])
    wk_a, bk_a = init_linear(keys[4], keys[5])
    wq_b, bq_b = init_linear(keys[6], keys[7])
    wk_b, bk_b = init_linear(keys[8], keys[9])

    params = dict(wq_a=wq_a, bq_a=bq_a, wk_a=wk_a, bk_a=bk_a,
                  wq_b=wq_b, bq_b=bq_b, wk_b=wk_b, bk_b=bk_b)

    out = multimodal_attention_fusion(modalA, modalB, params, num_heads=H)
    out = jax.block_until_ready(out)

    ref = _reference(modalA, modalB, params, num_heads=H)
    assert out.shape == (N, SA + SB, SA + SB)
    # Tolerance covers bf16 MXU inputs (f32 accumulation) and the EUP
    # approximate reciprocal in the softmax normalization; both contribute
    # well under 1e-3 absolute error on [0, 1] probabilities.
    err = float(jnp.max(jnp.abs(out - ref)))
    assert err < 1e-2, f"max abs error {err}"

    print("KERNEL_OK")
</pallas_src>

<mosaic_0001>
module attributes {stable_mosaic.version = 11 : i64} {
  func.func @_fusion_kernel(%arg0: i32, %arg1: memref<1x8x32xf32, #tpu.memory_space<vmem>>, %arg2: memref<1x8x32xf32, #tpu.memory_space<vmem>>, %arg3: memref<4x32x32xbf16, #tpu.memory_space<vmem>>, %arg4: memref<4x1x32xf32, #tpu.memory_space<vmem>>, %arg5: memref<1x16x16xf32, #tpu.memory_space<vmem>>) attributes {dimension_semantics = [#tpu.dimension_semantics<parallel>], iteration_bounds = array<i64: 2>, scalar_prefetch = 0 : i64, scratch_operands = 0 : i64, tpu.core_type = #tpu.core_type<tc>, window_params = [{transform_indices = @transform_0, window_bounds = array<i64: 1, 8, 32>}, {transform_indices = @transform_1, window_bounds = array<i64: 1, 8, 32>}, {pipeline_mode = #tpu.pipeline_mode<synchronous>, transform_indices = @transform_2, window_bounds = array<i64: 4, 32, 32>}, {pipeline_mode = #tpu.pipeline_mode<synchronous>, transform_indices = @transform_3, window_bounds = array<i64: 4, 1, 32>}, {transform_indices = @transform_4, window_bounds = array<i64: 1, 16, 16>}]} {
    %c0 = arith.constant 0 : index
    %c0_0 = arith.constant 0 : index
    %c0_1 = arith.constant 0 : index
    %0 = vector.load %arg1[%c0, %c0_0, %c0_1] : memref<1x8x32xf32, #tpu.memory_space<vmem>>, vector<1x8x32xf32>
    %1 = vector.shape_cast %0 : vector<1x8x32xf32> to vector<8x32xf32>
    %2 = arith.truncf %1 : vector<8x32xf32> to vector<8x32xbf16>
    %c0_2 = arith.constant 0 : index
    %c0_3 = arith.constant 0 : index
    %c0_4 = arith.constant 0 : index
    %3 = vector.load %arg2[%c0_2, %c0_3, %c0_4] : memref<1x8x32xf32, #tpu.memory_space<vmem>>, vector<1x8x32xf32>
    %4 = vector.shape_cast %3 : vector<1x8x32xf32> to vector<8x32xf32>
    %5 = arith.truncf %4 : vector<8x32xf32> to vector<8x32xbf16>
    %c0_5 = arith.constant 0 : index
    %c0_6 = arith.constant 0 : index
    %c0_7 = arith.constant 0 : index
    %6 = vector.load %arg3[%c0_5, %c0_6, %c0_7] : memref<4x32x32xbf16, #tpu.memory_space<vmem>>, vector<1x32x32xbf16>
    %7 = vector.shape_cast %6 : vector<1x32x32xbf16> to vector<32x32xbf16>
    %c0_8 = arith.constant 0 : index
    %c0_9 = arith.constant 0 : index
    %c0_10 = arith.constant 0 : index
    %8 = vector.load %arg4[%c0_8, %c0_9, %c0_10] : memref<4x1x32xf32, #tpu.memory_space<vmem>>, vector<1x1x32xf32>
    %9 = vector.shape_cast %8 : vector<1x1x32xf32> to vector<1x32xf32>
    %cst = arith.constant dense<0.000000e+00> : vector<8x32xf32>
    %10 = tpu.matmul %2, %7, %cst {dimension_numbers = #tpu.dot_dimension_numbers<[1], [0], [0], [1], [0, 0, 1, 1], [], []>} : vector<8x32xbf16>, vector<32x32xbf16>, vector<8x32xf32> -> vector<8x32xf32>
    %11 = vector.broadcast %9 : vector<1x32xf32> to vector<8x32xf32>
    %12 = arith.addf %10, %11 : vector<8x32xf32>
    %13 = vector.shape_cast %12 : vector<8x32xf32> to vector<1x8x32xf32>
    %14 = arith.truncf %13 : vector<1x8x32xf32> to vector<1x8x32xbf16>
    %c1 = arith.constant 1 : index
    %c0_11 = arith.constant 0 : index
    %c0_12 = arith.constant 0 : index
    %15 = vector.load %arg3[%c1, %c0_11, %c0_12] : memref<4x32x32xbf16, #tpu.memory_space<vmem>>, vector<1x32x32xbf16>
    %16 = vector.shape_cast %15 : vector<1x32x32xbf16> to vector<32x32xbf16>
    %c1_13 = arith.constant 1 : index
    %c0_14 = arith.constant 0 : index
    %c0_15 = arith.constant 0 : index
    %17 = vector.load %arg4[%c1_13, %c0_14, %c0_15] : memref<4x1x32xf32, #tpu.memory_space<vmem>>, vector<1x1x32xf32>
    %18 = vector.shape_cast %17 : vector<1x1x32xf32> to vector<1x32xf32>
    %cst_16 = arith.constant dense<0.000000e+00> : vector<8x32xf32>
    %19 = tpu.matmul %2, %16, %cst_16 {dimension_numbers = #tpu.dot_dimension_numbers<[1], [0], [0], [1], [0, 0, 1, 1], [], []>} : vector<8x32xbf16>, vector<32x32xbf16>, vector<8x32xf32> -> vector<8x32xf32>
    %20 = vector.broadcast %18 : vector<1x32xf32> to vector<8x32xf32>
    %21 = arith.addf %19, %20 : vector<8x32xf32>
    %22 = vector.shape_cast %21 : vector<8x32xf32> to vector<1x8x32xf32>
    %23 = arith.truncf %22 : vector<1x8x32xf32> to vector<1x8x32xbf16>
    %c2 = arith.constant 2 : index
    %c0_17 = arith.constant 0 : index
    %c0_18 = arith.constant 0 : index
    %24 = vector.load %arg3[%c2, %c0_17, %c0_18] : memref<4x32x32xbf16, #tpu.memory_space<vmem>>, vector<1x32x32xbf16>
    %25 = vector.shape_cast %24 : vector<1x32x32xbf16> to vector<32x32xbf16>
    %c2_19 = arith.constant 2 : index
    %c0_20 = arith.constant 0 : index
    %c0_21 = arith.constant 0 : index
    %26 = vector.load %arg4[%c2_19, %c0_20, %c0_21] : memref<4x1x32xf32, #tpu.memory_space<vmem>>, vector<1x1x32xf32>
    %27 = vector.shape_cast %26 : vector<1x1x32xf32> to vector<1x32xf32>
    %cst_22 = arith.constant dense<0.000000e+00> : vector<8x32xf32>
    %28 = tpu.matmul %5, %25, %cst_22 {dimension_numbers = #tpu.dot_dimension_numbers<[1], [0], [0], [1], [0, 0, 1, 1], [], []>} : vector<8x32xbf16>, vector<32x32xbf16>, vector<8x32xf32> -> vector<8x32xf32>
    %29 = vector.broadcast %27 : vector<1x32xf32> to vector<8x32xf32>
    %30 = arith.addf %28, %29 : vector<8x32xf32>
    %31 = vector.shape_cast %30 : vector<8x32xf32> to vector<1x8x32xf32>
    %32 = arith.truncf %31 : vector<1x8x32xf32> to vector<1x8x32xbf16>
    %c3 = arith.constant 3 : index
    %c0_23 = arith.constant 0 : index
    %c0_24 = arith.constant 0 : index
    %33 = vector.load %arg3[%c3, %c0_23, %c0_24] : memref<4x32x32xbf16, #tpu.memory_space<vmem>>, vector<1x32x32xbf16>
    %34 = vector.shape_cast %33 : vector<1x32x32xbf16> to vector<32x32xbf16>
    %c3_25 = arith.constant 3 : index
    %c0_26 = arith.constant 0 : index
    %c0_27 = arith.constant 0 : index
    %35 = vector.load %arg4[%c3_25, %c0_26, %c0_27] : memref<4x1x32xf32, #tpu.memory_space<vmem>>, vector<1x1x32xf32>
    %36 = vector.shape_cast %35 : vector<1x1x32xf32> to vector<1x32xf32>
    %cst_28 = arith.constant dense<0.000000e+00> : vector<8x32xf32>
    %37 = tpu.matmul %5, %34, %cst_28 {dimension_numbers = #tpu.dot_dimension_numbers<[1], [0], [0], [1], [0, 0, 1, 1], [], []>} : vector<8x32xbf16>, vector<32x32xbf16>, vector<8x32xf32> -> vector<8x32xf32>
    %38 = vector.broadcast %36 : vector<1x32xf32> to vector<8x32xf32>
    %39 = arith.addf %37, %38 : vector<8x32xf32>
    %40 = vector.shape_cast %39 : vector<8x32xf32> to vector<1x8x32xf32>
    %41 = arith.truncf %40 : vector<1x8x32xf32> to vector<1x8x32xbf16>
    %42 = tpu.concatenate %23, %41 in 1 : vector<1x8x32xbf16>, vector<1x8x32xbf16> -> vector<1x16x32xbf16>
    %43 = tpu.concatenate %41, %23 in 1 : vector<1x8x32xbf16>, vector<1x8x32xbf16> -> vector<1x16x32xbf16>
    "tpu.trace_start"() <{level = 10 : i32, message = "bqe,bke->bqk"}> : () -> ()
    %cst_29 = arith.constant dense<0.000000e+00> : vector<1x8x16xf32>
    %44 = tpu.matmul %14, %42, %cst_29 {dimension_numbers = #tpu.dot_dimension_numbers<[2], [2], [1], [1], [0, 0, 0, 1, 1, 1], [0], [0]>} : vector<1x8x32xbf16>, vector<1x16x32xbf16>, vector<1x8x16xf32> -> vector<1x8x16xf32>
    %cst_30 = arith.constant dense<0.000000e+00> : vector<1x8x16xf32>
    %45 = tpu.matmul %32, %43, %cst_30 {dimension_numbers = #tpu.dot_dimension_numbers<[2], [2], [1], [1], [0, 0, 0, 1, 1, 1], [0], [0]>} : vector<1x8x32xbf16>, vector<1x16x32xbf16>, vector<1x8x16xf32> -> vector<1x8x16xf32>
    "tpu.trace_stop"() : () -> ()
    %46 = tpu.iota {dimensions = array<i32: 2>} : vector<1x8x16xi32>
    %c8_i32 = arith.constant 8 : i32
    %47 = vector.broadcast %c8_i32 : i32 to vector<1x8x16xi32>
    %48 = arith.cmpi slt, %46, %47 : vector<1x8x16xi32>
    %cst_31 = arith.constant -1.000000e+30 : f32
    %49 = vector.broadcast %cst_31 : f32 to vector<1x8x16xf32>
    %50 = arith.select %48, %44, %49 : vector<1x8x16xi1>, vector<1x8x16xf32>
    %cst_32 = arith.constant dense<0xFF800000> : vector<1x8xf32>
    %51 = vector.multi_reduction <maximumf>, %50, %cst_32 [2] : vector<1x8x16xf32> to vector<1x8xf32>
    %52 = vector.shape_cast %51 : vector<1x8xf32> to vector<1x8x1xf32>
    %cst_33 = arith.constant -1.000000e+30 : f32
    %53 = vector.broadcast %cst_33 : f32 to vector<1x8x16xf32>
    %54 = arith.select %48, %53, %44 : vector<1x8x16xi1>, vector<1x8x16xf32>
    %cst_34 = arith.constant dense<0xFF800000> : vector<1x8xf32>
    %55 = vector.multi_reduction <maximumf>, %54, %cst_34 [2] : vector<1x8x16xf32> to vector<1x8xf32>
    %56 = vector.shape_cast %55 : vector<1x8xf32> to vector<1x8x1xf32>
    %57 = vector.shape_cast %52 : vector<1x8x1xf32> to vector<1x8x1xf32>
    %58 = vector.broadcast %57 : vector<1x8x1xf32> to vector<1x8x16xf32>
    %59 = vector.shape_cast %56 : vector<1x8x1xf32> to vector<1x8x1xf32>
    %60 = vector.broadcast %59 : vector<1x8x1xf32> to vector<1x8x16xf32>
    %61 = arith.select %48, %58, %60 : vector<1x8x16xi1>, vector<1x8x16xf32>
    %62 = arith.subf %44, %61 : vector<1x8x16xf32>
    %63 = math.exp %62 : vector<1x8x16xf32>
    %cst_35 = arith.constant 0.000000e+00 : f32
    %64 = vector.broadcast %cst_35 : f32 to vector<1x8x16xf32>
    %65 = arith.select %48, %63, %64 : vector<1x8x16xi1>, vector<1x8x16xf32>
    %cst_36 = arith.constant dense<0.000000e+00> : vector<1x8xf32>
    %66 = vector.multi_reduction <add>, %65, %cst_36 [2] : vector<1x8x16xf32> to vector<1x8xf32>
    %67 = vector.shape_cast %66 : vector<1x8xf32> to vector<1x8x1xf32>
    %cst_37 = arith.constant 0.000000e+00 : f32
    %68 = vector.broadcast %cst_37 : f32 to vector<1x8x16xf32>
    %69 = arith.select %48, %68, %63 : vector<1x8x16xi1>, vector<1x8x16xf32>
    %cst_38 = arith.constant dense<0.000000e+00> : vector<1x8xf32>
    %70 = vector.multi_reduction <add>, %69, %cst_38 [2] : vector<1x8x16xf32> to vector<1x8xf32>
    %71 = vector.shape_cast %70 : vector<1x8xf32> to vector<1x8x1xf32>
    %72 = tpu.reciprocal %67 {approx = true} : vector<1x8x1xf32> -> vector<1x8x1xf32>
    %73 = tpu.reciprocal %71 {approx = true} : vector<1x8x1xf32> -> vector<1x8x1xf32>
    %74 = vector.shape_cast %72 : vector<1x8x1xf32> to vector<1x8x1xf32>
    %75 = vector.broadcast %74 : vector<1x8x1xf32> to vector<1x8x16xf32>
    %76 = vector.shape_cast %73 : vector<1x8x1xf32> to vector<1x8x1xf32>
    %77 = vector.broadcast %76 : vector<1x8x1xf32> to vector<1x8x16xf32>
    %78 = arith.select %48, %75, %77 : vector<1x8x16xi1>, vector<1x8x16xf32>
    %79 = arith.mulf %63, %78 : vector<1x8x16xf32>
    %c0_39 = arith.constant 0 : index
    %c0_40 = arith.constant 0 : index
    %c0_41 = arith.constant 0 : index
    %80 = vector.load %arg5[%c0_39, %c0_40, %c0_41] : memref<1x16x16xf32, #tpu.memory_space<vmem>>, vector<1x8x16xf32>
    tpu.vector_store %arg5[%c0_39, %c0_40, %c0_41], %79 {strides = array<i32>} : memref<1x16x16xf32, #tpu.memory_space<vmem>>, vector<1x8x16xf32>,
    %81 = tpu.iota {dimensions = array<i32: 2>} : vector<1x8x16xi32>
    %c8_i32_42 = arith.constant 8 : i32
    %82 = vector.broadcast %c8_i32_42 : i32 to vector<1x8x16xi32>
    %83 = arith.cmpi slt, %81, %82 : vector<1x8x16xi32>
    %cst_43 = arith.constant -1.000000e+30 : f32
    %84 = vector.broadcast %cst_43 : f32 to vector<1x8x16xf32>
    %85 = arith.select %83, %45, %84 : vector<1x8x16xi1>, vector<1x8x16xf32>
    %cst_44 = arith.constant dense<0xFF800000> : vector<1x8xf32>
    %86 = vector.multi_reduction <maximumf>, %85, %cst_44 [2] : vector<1x8x16xf32> to vector<1x8xf32>
    %87 = vector.shape_cast %86 : vector<1x8xf32> to vector<1x8x1xf32>
    %cst_45 = arith.constant -1.000000e+30 : f32
    %88 = vector.broadcast %cst_45 : f32 to vector<1x8x16xf32>
    %89 = arith.select %83, %88, %45 : vector<1x8x16xi1>, vector<1x8x16xf32>
    %cst_46 = arith.constant dense<0xFF800000> : vector<1x8xf32>
    %90 = vector.multi_reduction <maximumf>, %89, %cst_46 [2] : vector<1x8x16xf32> to vector<1x8xf32>
    %91 = vector.shape_cast %90 : vector<1x8xf32> to vector<1x8x1xf32>
    %92 = vector.shape_cast %87 : vector<1x8x1xf32> to vector<1x8x1xf32>
    %93 = vector.broadcast %92 : vector<1x8x1xf32> to vector<1x8x16xf32>
    %94 = vector.shape_cast %91 : vector<1x8x1xf32> to vector<1x8x1xf32>
    %95 = vector.broadcast %94 : vector<1x8x1xf32> to vector<1x8x16xf32>
    %96 = arith.select %83, %93, %95 : vector<1x8x16xi1>, vector<1x8x16xf32>
    %97 = arith.subf %45, %96 : vector<1x8x16xf32>
    %98 = math.exp %97 : vector<1x8x16xf32>
    %cst_47 = arith.constant 0.000000e+00 : f32
    %99 = vector.broadcast %cst_47 : f32 to vector<1x8x16xf32>
    %100 = arith.select %83, %98, %99 : vector<1x8x16xi1>, vector<1x8x16xf32>
    %cst_48 = arith.constant dense<0.000000e+00> : vector<1x8xf32>
    %101 = vector.multi_reduction <add>, %100, %cst_48 [2] : vector<1x8x16xf32> to vector<1x8xf32>
    %102 = vector.shape_cast %101 : vector<1x8xf32> to vector<1x8x1xf32>
    %cst_49 = arith.constant 0.000000e+00 : f32
    %103 = vector.broadcast %cst_49 : f32 to vector<1x8x16xf32>
    %104 = arith.select %83, %103, %98 : vector<1x8x16xi1>, vector<1x8x16xf32>
    %cst_50 = arith.constant dense<0.000000e+00> : vector<1x8xf32>
    %105 = vector.multi_reduction <add>, %104, %cst_50 [2] : vector<1x8x16xf32> to vector<1x8xf32>
    %106 = vector.shape_cast %105 : vector<1x8xf32> to vector<1x8x1xf32>
    %107 = tpu.reciprocal %102 {approx = true} : vector<1x8x1xf32> -> vector<1x8x1xf32>
    %108 = tpu.reciprocal %106 {approx = true} : vector<1x8x1xf32> -> vector<1x8x1xf32>
    %109 = vector.shape_cast %107 : vector<1x8x1xf32> to vector<1x8x1xf32>
    %110 = vector.broadcast %109 : vector<1x8x1xf32> to vector<1x8x16xf32>
    %111 = vector.shape_cast %108 : vector<1x8x1xf32> to vector<1x8x1xf32>
    %112 = vector.broadcast %111 : vector<1x8x1xf32> to vector<1x8x16xf32>
    %113 = arith.select %83, %110, %112 : vector<1x8x16xi1>, vector<1x8x16xf32>
    %114 = arith.mulf %98, %113 : vector<1x8x16xf32>
    %c0_51 = arith.constant 0 : index
    %c8 = arith.constant 8 : index
    %c0_52 = arith.constant 0 : index
    %115 = vector.load %arg5[%c0_51, %c8, %c0_52] : memref<1x16x16xf32, #tpu.memory_space<vmem>>, vector<1x8x16xf32>
    tpu.vector_store %arg5[%c0_51, %c8, %c0_52], %114 {strides = array<i32>} : memref<1x16x16xf32, #tpu.memory_space<vmem>>, vector<1x8x16xf32>,
    return
  }
  func.func @transform_0(%arg0: i32) -> (i32, i32, i32) {
    %c0_i32 = arith.constant 0 : i32
    %c0_i32_0 = arith.constant 0 : i32
    %c0_i32_1 = arith.constant 0 : i32
    return %arg0, %c0_i32, %c0_i32_0 : i32, i32, i32
  }
  func.func @transform_1(%arg0: i32) -> (i32, i32, i32) {
    %c0_i32 = arith.constant 0 : i32
    %c0_i32_0 = arith.constant 0 : i32
    %c0_i32_1 = arith.constant 0 : i32
    return %arg0, %c0_i32, %c0_i32_0 : i32, i32, i32
  }
  func.func @transform_2(%arg0: i32) -> (i32, i32, i32) {
    %c0_i32 = arith.constant 0 : i32
    %c0_i32_0 = arith.constant 0 : i32
    %c0_i32_1 = arith.constant 0 : i32
    %c0_i32_2 = arith.constant 0 : i32
    return %c0_i32, %c0_i32_0, %c0_i32_1 : i32, i32, i32
  }
  func.func @transform_3(%arg0: i32) -> (i32, i32, i32) {
    %c0_i32 = arith.constant 0 : i32
    %c0_i32_0 = arith.constant 0 : i32
    %c0_i32_1 = arith.constant 0 : i32
    %c0_i32_2 = arith.constant 0 : i32
    return %c0_i32, %c0_i32_0, %c0_i32_1 : i32, i32, i32
  }
  func.func @transform_4(%arg0: i32) -> (i32, i32, i32) {
    %c0_i32 = arith.constant 0 : i32
    %c0_i32_0 = arith.constant 0 : i32
    %c0_i32_1 = arith.constant 0 : i32
    return %arg0, %c0_i32, %c0_i32_0 : i32, i32, i32
  }
}

</mosaic_0001>

<llo_original>
// kernel: tpu_custom_call.1
$region0: #{tpu_custom_call.1}
  #allocation0 [shape = 'u32[]', space=smem, size = 0x4, offset = 0x4, fixed_abs, tag = 'smem constant byte address 0x4 - core index']
  #allocation1 [shape = 'u32[144,128]{1,0:T(1,128)}', space=vmem, size = 0x12000, scoped, tag = 'internal scratch']
  %s0 = inlined_call_operand.hbm [shape: f32[2,8,32], index: 0, kind: input, shape index: {}]
  %s1 = inlined_call_operand.hbm [shape: f32[2,8,32], index: 1, kind: input, shape index: {}]
  %s2 = inlined_call_operand.hbm [shape: bf16[4,32,32], index: 2, kind: input, shape index: {}]
  %s3 = inlined_call_operand.vmem [shape: f32[4,1,32], index: 3, kind: input, shape index: {}]
  %s4 = inlined_call_operand.hbm [shape: f32[2,16,16], index: 4, kind: output, shape index: {}]
  %s5 = sld [smem:[#allocation0]]
  $region61: #{tpu_custom_call.1} parent=0
    _
  %s7 = ssub.s32 1, %s5
  %s8 = scalar_select 0, %s7, %s5
  $region1: #{tpu_custom_call.1} parent=0
    #allocation2 [shape = 'u8[8192]{0}', space=vmem, size = 0x2000, scoped, tag = 'input window, operand 0']
    #allocation3 [shape = 's32[2]{0}', space=sflag, size = 0x8, scoped, tag = 'scoped memory for tpu_custom_call.1']
    #allocation4 [shape = 's32[2]{0}', space=sflag, size = 0x8, scoped, tag = 'scoped memory for tpu_custom_call.1']
    #allocation5 [shape = 'u8[8192]{0}', space=vmem, size = 0x2000, scoped, tag = 'input window, operand 1']
    #allocation6 [shape = 's32[2]{0}', space=sflag, size = 0x8, scoped, tag = 'scoped memory for tpu_custom_call.1']
    #allocation7 [shape = 'u8[32768]{0}', space=vmem, size = 0x8000, scoped, tag = 'input window, operand 2, single buffered']
    #allocation8 [shape = 'u8[16384]{0}', space=vmem, size = 0x4000, scoped, tag = 'output window, operand 0']
    %9 = vsyncpa [#allocation3], 0
    %s10 = scalar_lea.sflag [#allocation3], 1
    %11 = vsyncpa %s10, 0
    %12 = vsyncpa [#allocation6], 0
    %s13 = scalar_lea.sflag [#allocation6], 1
    %14 = vsyncpa %s13, 0
    %15 = vsyncpa [#allocation4], 0
    %s16 = scalar_lea.sflag [#allocation4], 1
    %17 = vsyncpa %s16, 0
    loop: start=0, step=1, limit=4
    $region2: #{tpu_custom_call.1} parent=1 // loop_pre_header
      _
    $region3: #{tpu_custom_call.1} parent=1 // loop_header
      %s19 = sphi 0, %s23
      %p20 = scmp.ge.s32.totalorder %s19, 4
      %s29 = sphi 0, %s31
      %s32 = sphi 0, %s29
      %s33 = sphi 0, %s32
      %s49 = sphi 0, %s33
      %s55 = sphi 0, %s57
      %s58 = sphi 0, %s55
      %s59 = sphi 0, %s58
      %s75 = sphi 0, %s59
      %s79 = sphi 0, %s79
      %s81 = sphi 0, %s79
      %s82 = sphi 0, %s81
      %s96 = sphi 0, %s82
      %s100 = sphi 0, %s100
      %s102 = sphi 0, %s100
      %s103 = sphi 0, %s102
      %s117 = sphi 0, %s103
      %s123 = sphi 0, %s125
      %s126 = sphi 0, %s123
      %s127 = sphi 0, %s126
      %s143 = sphi 0, %s127
    $region4: #{tpu_custom_call.1} parent=1 // loop_header_branch
      %22 = sbr.rel (%p20) target = $region8
    $region5: #{tpu_custom_call.1} parent=1 // loop_body
      %s24 = ssub.s32 %s19, 1
      %s25 = ssub.s32 %s19, 2
      %s26 = sadd.s32 %s19, 1
      %s27 = ssub.s32 %s19, %s26
      %p28 = scmp.eq.s32.totalorder %s27, 0
      %s30 = sadd.s32 %s29, 1
      %s31 = scalar_select %p28, %s29, %s30
      %p34 = pneg %p28
      %p35 = scmp.eq.s32.totalorder %s19, 1
      %p36 = por %p34, %p35
      %p37 = scmp.ne.s32.totalorder %s29, %s32
      %p38 = scmp.eq.s32.totalorder %s19, 0
      %p39 = por %p37, %p38
      %p40 = scmp.ne.s32.totalorder %s29, %s32
      %p41 = scmp.eq.s32.totalorder %s24, 1
      %p42 = por %p40, %p41
      %p43 = scmp.ne.s32.totalorder %s32, %s33
      %p44 = scmp.eq.s32.totalorder %s24, 0
      %p45 = por %p43, %p44
      %p46 = scmp.ne.s32.totalorder %s32, %s33
      %p47 = scmp.eq.s32.totalorder %s25, 1
      %p48 = por %p46, %p47
      %p50 = scmp.ne.s32.totalorder %s33, %s49
      %p51 = scmp.eq.s32.totalorder %s25, 0
      %p52 = por %p50, %p51
      %s53 = ssub.s32 %s19, %s26
      %p54 = scmp.eq.s32.totalorder %s53, 0
      %s56 = sadd.s32 %s55, 1
      %s57 = scalar_select %p54, %s55, %s56
      %p60 = pneg %p54
      %p61 = scmp.eq.s32.totalorder %s19, 1
      %p62 = por %p60, %p61
      %p63 = scmp.ne.s32.totalorder %s55, %s58
      %p64 = scmp.eq.s32.totalorder %s19, 0
      %p65 = por %p63, %p64
      %p66 = scmp.ne.s32.totalorder %s55, %s58
      %p67 = scmp.eq.s32.totalorder %s24, 1
      %p68 = por %p66, %p67
      %p69 = scmp.ne.s32.totalorder %s58, %s59
      %p70 = scmp.eq.s32.totalorder %s24, 0
      %p71 = por %p69, %p70
      %p72 = scmp.ne.s32.totalorder %s58, %s59
      %p73 = scmp.eq.s32.totalorder %s25, 1
      %p74 = por %p72, %p73
      %p76 = scmp.ne.s32.totalorder %s59, %s75
      %p77 = scmp.eq.s32.totalorder %s25, 0
      %p78 = por %p76, %p77
      %s80 = sadd.s32 %s79, 1
      %p83 = scmp.eq.s32.totalorder %s19, 1
      %p84 = scmp.ne.s32.totalorder %s79, %s81
      %p85 = scmp.eq.s32.totalorder %s19, 0
      %p86 = por %p84, %p85
      %p87 = scmp.ne.s32.totalorder %s79, %s81
      %p88 = scmp.eq.s32.totalorder %s24, 1
      %p89 = por %p87, %p88
      %p90 = scmp.ne.s32.totalorder %s81, %s82
      %p91 = scmp.eq.s32.totalorder %s24, 0
      %p92 = por %p90, %p91
      %p93 = scmp.ne.s32.totalorder %s81, %s82
      %p94 = scmp.eq.s32.totalorder %s25, 1
      %p95 = por %p93, %p94
      %p97 = scmp.ne.s32.totalorder %s82, %s96
      %p98 = scmp.eq.s32.totalorder %s25, 0
      %p99 = por %p97, %p98
      %s101 = sadd.s32 %s100, 1
      %p104 = scmp.eq.s32.totalorder %s19, 1
      %p105 = scmp.ne.s32.totalorder %s100, %s102
      %p106 = scmp.eq.s32.totalorder %s19, 0
      %p107 = por %p105, %p106
      %p108 = scmp.ne.s32.totalorder %s100, %s102
      %p109 = scmp.eq.s32.totalorder %s24, 1
      %p110 = por %p108, %p109
      %p111 = scmp.ne.s32.totalorder %s102, %s103
      %p112 = scmp.eq.s32.totalorder %s24, 0
      %p113 = por %p111, %p112
      %p114 = scmp.ne.s32.totalorder %s102, %s103
      %p115 = scmp.eq.s32.totalorder %s25, 1
      %p116 = por %p114, %p115
      %p118 = scmp.ne.s32.totalorder %s103, %s117
      %p119 = scmp.eq.s32.totalorder %s25, 0
      %p120 = por %p118, %p119
      %s121 = ssub.s32 %s19, %s26
      %p122 = scmp.eq.s32.totalorder %s121, 0
      %s124 = sadd.s32 %s123, 1
      %s125 = scalar_select %p122, %s123, %s124
      %p128 = pneg %p122
      %p129 = scmp.eq.s32.totalorder %s19, 1
      %p130 = por %p128, %p129
      %p131 = scmp.ne.s32.totalorder %s123, %s126
      %p132 = scmp.eq.s32.totalorder %s19, 0
      %p133 = por %p131, %p132
      %p134 = scmp.ne.s32.totalorder %s123, %s126
      %p135 = scmp.eq.s32.totalorder %s24, 1
      %p136 = por %p134, %p135
      %p137 = scmp.ne.s32.totalorder %s126, %s127
      %p138 = scmp.eq.s32.totalorder %s24, 0
      %p139 = por %p137, %p138
      %p140 = scmp.ne.s32.totalorder %s126, %s127
      %p141 = scmp.eq.s32.totalorder %s25, 1
      %p142 = por %p140, %p141
      %p144 = scmp.ne.s32.totalorder %s127, %s143
      %p145 = scmp.eq.s32.totalorder %s25, 0
      %p146 = por %p144, %p145
      %p147 = scmp.le.s32.totalorder 1, %s19
      %p148 = scmp.lt.s32.totalorder %s19, 3
      %p149 = pnand %p147, %p148
      %p150 = pneg %p149
      // Predicated region
      $region9: #{tpu_custom_call.1} parent=5 // pred_check
        _
      $region10: #{tpu_custom_call.1} parent=5 // pred_check_branch
        %152 = sbr.rel (%p149) target = $region12
      $region11: #{tpu_custom_call.1} parent=5 // pred_region
        %s153 = ssub.s32 %s19, 1
        // Predicated region
        $region13: #{tpu_custom_call.1} parent=11 // pred_check
          %p154 = pneg %p92
        $region14: #{tpu_custom_call.1} parent=11 // pred_check_branch
          %156 = sbr.rel (%p154) target = $region16
        $region15: #{tpu_custom_call.1} parent=11 // pred_region
          %s158 = ssub.s32 1024, 1024
          %159 = vsyncadd [#allocation6], %s158
          %s160 = sshll.u32 [#allocation7], 4
          %s161 = int_to_ptr.vmem [resolvable:$true] %s160
          %166 = dma.hbm_to_vmem [thread:$0]  %s2, 1024, %s161, [#allocation6], 64, 64, 4
        $region16: #{tpu_custom_call.1} parent=11 // pred_fallthru
          _
        // Predicated region
        $region17: #{tpu_custom_call.1} parent=11 // pred_check
          %p167 = pneg %p113
        $region18: #{tpu_custom_call.1} parent=11 // pred_check_branch
          %169 = sbr.rel (%p167) target = $region20
        $region19: #{tpu_custom_call.1} parent=11 // pred_region
          _
        $region20: #{tpu_custom_call.1} parent=11 // pred_fallthru
          _
      $region12: #{tpu_custom_call.1} parent=5 // pred_fallthru
        _
      %p170 = scmp.lt.s32.totalorder %s19, 2
      // Predicated region
      $region21: #{tpu_custom_call.1} parent=5 // pred_check
        %p171 = pneg %p170
      $region22: #{tpu_custom_call.1} parent=5 // pred_check_branch
        %173 = sbr.rel (%p171) target = $region24
      $region23: #{tpu_custom_call.1} parent=5 // pred_region
        // Predicated region
        $region25: #{tpu_custom_call.1} parent=23 // pred_check
          %p174 = pneg %p39
        $region26: #{tpu_custom_call.1} parent=23 // pred_check_branch
          %176 = sbr.rel (%p174) target = $region28
        $region27: #{tpu_custom_call.1} parent=23 // pred_region
          %s177 = sand.u32 %s29, 1
          %s178 = scalar_lea.sflag [#allocation3], %s177
          %s179 = sand.u32 %s29, 1
          %s180 = smul.addr %s179, 8
          %s181 = scalar_lea.vmem [#allocation2], %s180
          %s183 = ssub.s32 128, 128
          %184 = vsyncadd %s178, %s183
          %s185 = smul.addr %s19, 128
          %s186 = scalar_lea.hbm %s0, %s185
          %s188 = sshll.u32 %s181, 4
          %s189 = int_to_ptr.vmem [resolvable:$true] %s188
          %191 = dma.hbm_to_vmem [thread:$0]  %s186, 128, %s189, %s178
        $region28: #{tpu_custom_call.1} parent=23 // pred_fallthru
          _
        // Predicated region
        $region29: #{tpu_custom_call.1} parent=23 // pred_check
          %p192 = pneg %p65
        $region30: #{tpu_custom_call.1} parent=23 // pred_check_branch
          %194 = sbr.rel (%p192) target = $region32
        $region31: #{tpu_custom_call.1} parent=23 // pred_region
          %s195 = sand.u32 %s19, 1
          %s196 = scalar_lea.sflag [#allocation6], %s195
          %s197 = sand.u32 %s55, 1
          %s198 = smul.addr %s197, 8
          %s199 = scalar_lea.vmem [#allocation5], %s198
          %s201 = ssub.s32 128, 128
          %202 = vsyncadd %s196, %s201
          %s203 = smul.addr %s19, 128
          %s204 = scalar_lea.hbm %s1, %s203
          %s206 = sshll.u32 %s199, 4
          %s207 = int_to_ptr.vmem [resolvable:$true] %s206
          %209 = dma.hbm_to_vmem [thread:$0]  %s204, 128, %s207, %s196
        $region32: #{tpu_custom_call.1} parent=23 // pred_fallthru
          _
      $region24: #{tpu_custom_call.1} parent=5 // pred_fallthru
        _
      %p210 = scmp.le.s32.totalorder 1, %s19
      %p211 = scmp.lt.s32.totalorder %s19, 3
      %p212 = pnand %p210, %p211
      %p213 = pneg %p212
      // Predicated region
      $region33: #{tpu_custom_call.1} parent=5 // pred_check
        _
      $region34: #{tpu_custom_call.1} parent=5 // pred_check_branch
        %215 = sbr.rel (%p212) target = $region36
      $region35: #{tpu_custom_call.1} parent=5 // pred_region
        %s216 = ssub.s32 %s19, 1
        %s217 = sand.u32 %s32, 1
        %s218 = scalar_lea.sflag [#allocation3], %s217
        %s219 = sand.u32 %s32, 1
        %s220 = smul.addr %s219, 8
        %s221 = scalar_lea.vmem [#allocation2], %s220
        // Predicated region
        $region37: #{tpu_custom_call.1} parent=35 // pred_check
          %p222 = pneg %p45
        $region38: #{tpu_custom_call.1} parent=35 // pred_check_branch
          %224 = sbr.rel (%p222) target = $region40
        $region39: #{tpu_custom_call.1} parent=35 // pred_region
          %225 = dma.done %s218, 128
        $region40: #{tpu_custom_call.1} parent=35 // pred_fallthru
          _
        %s226 = sand.u32 %s24, 1
        %s227 = scalar_lea.sflag [#allocation6], %s226
        %s228 = sand.u32 %s58, 1
        %s229 = smul.addr %s228, 8
        %s230 = scalar_lea.vmem [#allocation5], %s229
        // Predicated region
        $region41: #{tpu_custom_call.1} parent=35 // pred_check
          %p231 = pneg %p71
        $region42: #{tpu_custom_call.1} parent=35 // pred_check_branch
          %233 = sbr.rel (%p231) target = $region44
        $region43: #{tpu_custom_call.1} parent=35 // pred_region
          %234 = dma.done %s227, 128
        $region44: #{tpu_custom_call.1} parent=35 // pred_fallthru
          _
        // Predicated region
        $region45: #{tpu_custom_call.1} parent=35 // pred_check
          %p235 = pneg %p92
        $region46: #{tpu_custom_call.1} parent=35 // pred_check_branch
          %237 = sbr.rel (%p235) target = $region48
        $region47: #{tpu_custom_call.1} parent=35 // pred_region
          %238 = dma.done [#allocation6], 1024
        $region48: #{tpu_custom_call.1} parent=35 // pred_fallthru
          _
        %s239 = sand.u32 %s32, 1
        %s240 = scalar_lea.sflag [#allocation3], %s239
        %s241 = sand.u32 %s32, 1
        %s242 = smul.addr %s241, 8
        %s243 = scalar_lea.vmem [#allocation2], %s242
        %p244 = pneg %p45
        %p245 = pneg %p42
        %s246 = sand.u32 %s24, 1
        %s247 = scalar_lea.sflag [#allocation6], %s246
        %s248 = sand.u32 %s58, 1
        %s249 = smul.addr %s248, 8
        %s250 = scalar_lea.vmem [#allocation5], %s249
        %p251 = pneg %p71
        %p252 = pneg %p68
        %p253 = pneg %p92
        %p254 = pneg %p89
        %p255 = pneg %p113
        %p256 = pneg %p110
        %p257 = pneg %p139
        %p258 = pneg %p136
        %s259 = sand.u32 %s126, 1
        %s260 = scalar_lea.sflag [#allocation4], %s259
        %s261 = sand.u32 %s126, 1
        %s262 = smul.addr %s261, 16
        %s263 = scalar_lea.vmem [#allocation8], %s262
        %v265 = vld [vmem:[%s221] sm:$0xff]
        %v266 = vpack.c.bf16 %v265, %v265
        %v267 = vld [vmem:[%s230] sm:$0xff]
        %v268 = vpack.c.bf16 %v267, %v267
        %v269 = vld [vmem:[#allocation7] sm:$0xf]
        %v270 = vld [vmem:[#allocation7 + $0x4] sm:$0xf]
        %v271 = vld [vmem:[#allocation7 + $0x8] sm:$0xf]
        %v272 = vld [vmem:[#allocation7 + $0xc] sm:$0xf]
        %v273 = vld [vmem:[%s3] sm:$0x1]
        %v275 = vlaneseq
        %v276 = vshrl.u32 %v275, 7
        %v277 = vsub.s32 0, %v276
        %v278 = vrot.slane %v273, %v277
        %v284 = vunpack.c.l.b16 %v269
        %v285 = vunpack.c.l.b16 %v270
        %v286 = vunpack.c.l.b16 %v271
        %v287 = vunpack.c.l.b16 %v272
        %v288 = vpack.c.b16 %v285, %v284
        %v289 = vpack.c.b16 %v287, %v286
        %vm292 = vcmask 261120
        %v294 = vsel %vm292, %v266, 0
        %296 = vmatprep.subr.bf16.mxu0 0
        %297 = vmatpush1.bf16.msra.mxu0 0
        %298 = vmatprep.subr.bf16.mxu0 0
        %299 = vmatpush1.bf16.msra.mxu0 0
        %300 = vmatprep.subr.bf16.mxu0 0
        %301 = vmatpush1.bf16.msra.mxu0 0
        %302 = vmatprep.subr.bf16.mxu0 0
        %303 = vmatpush1.bf16.msra.mxu0 0
        %304 = vmatprep.subr.bf16.mxu0 0
        %305 = vmatpush1.bf16.msra.mxu0 0
        %306 = vmatprep.subr.bf16.mxu0 0
        %307 = vmatpush1.bf16.msra.mxu0 0
        %308 = vmatprep.subr.bf16.mxu0 0
        %309 = vmatpush1.bf16.msra.mxu0 %v289
        %310 = vmatprep.subr.bf16.mxu0 0
        %311 = vmatpush1.bf16.msra.mxu0 %v288
        %312 = vmatprep.subr.bf16.mxu0 0
        %313 = vmatpush2.bf16.msra.mxu0 0
        %314 = vmatprep.subr.bf16.mxu0 0
        %315 = vmatpush2.bf16.msra.mxu0 0
        %316 = vmatprep.subr.bf16.mxu0 0
        %317 = vmatpush2.bf16.msra.mxu0 0
        %318 = vmatprep.subr.bf16.mxu0 0
        %319 = vmatpush2.bf16.msra.mxu0 0
        %320 = vmatprep.subr.bf16.mxu0 0
        %321 = vmatpush2.bf16.msra.mxu0 0
        %322 = vmatprep.subr.bf16.mxu0 0
        %323 = vmatpush2.bf16.msra.mxu0 0
        %324 = vmatprep.subr.bf16.mxu0 0
        %325 = vmatpush2.bf16.msra.mxu0 0
        %326 = vmatprep.subr.bf16.mxu0 0
        %327 = vmatpush2.bf16.msra.mxu0 0
        %328 = vmatprep.mubr.bf16.mxu0 0
        %329 = vmatmul.mubr.bf16.gmra.mxu0 %v294
        %v330 = vpop.f32.mrf.mxu0
        %v331 = vadd.f32 %v278, %v330
        %v332 = vpop.f32.mrf.mxu0
        %v333 = vpop.f32.mrf.mxu0
        %v334 = vpop.f32.mrf.mxu0
        %335 = vdwg.mxu0
        %v336 = vpack.c.bf16 %v331, %v331
        %s337 = scalar_lea.vmem [#allocation7], 16
        %v338 = vld [vmem:[%s337] sm:$0xf]
        %v339 = vld [vmem:[%s337 + $0x4] sm:$0xf]
        %v340 = vld [vmem:[%s337 + $0x8] sm:$0xf]
        %v341 = vld [vmem:[%s337 + $0xc] sm:$0xf]
        %s342 = scalar_lea.vmem %s3, 1
        %v343 = vld [vmem:[%s342] sm:$0x1]
        %v345 = vlaneseq
        %v346 = vshrl.u32 %v345, 7
        %v347 = vsub.s32 0, %v346
        %v348 = vrot.slane %v343, %v347
        %v354 = vunpack.c.l.b16 %v338
        %v355 = vunpack.c.l.b16 %v339
        %v356 = vunpack.c.l.b16 %v340
        %v357 = vunpack.c.l.b16 %v341
        %v358 = vpack.c.b16 %v355, %v354
        %v359 = vpack.c.b16 %v357, %v356
        %362 = vmatprep.subr.bf16.mxu0 0
        %363 = vmatpush1.bf16.msra.mxu0 0
        %364 = vmatprep.subr.bf16.mxu0 0
        %365 = vmatpush1.bf16.msra.mxu0 0
        %366 = vmatprep.subr.bf16.mxu0 0
        %367 = vmatpush1.bf16.msra.mxu0 0
        %368 = vmatprep.subr.bf16.mxu0 0
        %369 = vmatpush1.bf16.msra.mxu0 0
        %370 = vmatprep.subr.bf16.mxu0 0
        %371 = vmatpush1.bf16.msra.mxu0 0
        %372 = vmatprep.subr.bf16.mxu0 0
        %373 = vmatpush1.bf16.msra.mxu0 0
        %374 = vmatprep.subr.bf16.mxu0 0
        %375 = vmatpush1.bf16.msra.mxu0 %v359
        %376 = vmatprep.subr.bf16.mxu0 0
        %377 = vmatpush1.bf16.msra.mxu0 %v358
        %378 = vmatprep.subr.bf16.mxu0 0
        %379 = vmatpush2.bf16.msra.mxu0 0
        %380 = vmatprep.subr.bf16.mxu0 0
        %381 = vmatpush2.bf16.msra.mxu0 0
        %382 = vmatprep.subr.bf16.mxu0 0
        %383 = vmatpush2.bf16.msra.mxu0 0
        %384 = vmatprep.subr.bf16.mxu0 0
        %385 = vmatpush2.bf16.msra.mxu0 0
        %386 = vmatprep.subr.bf16.mxu0 0
        %387 = vmatpush2.bf16.msra.mxu0 0
        %388 = vmatprep.subr.bf16.mxu0 0
        %389 = vmatpush2.bf16.msra.mxu0 0
        %390 = vmatprep.subr.bf16.mxu0 0
        %391 = vmatpush2.bf16.msra.mxu0 0
        %392 = vmatprep.subr.bf16.mxu0 0
        %393 = vmatpush2.bf16.msra.mxu0 0
        %394 = vmatprep.mubr.bf16.mxu0 0
        %395 = vmatmul.mubr.bf16.gmra.mxu0 %v294
        %v396 = vpop.f32.mrf.mxu0
        %v397 = vadd.f32 %v348, %v396
        %v398 = vpop.f32.mrf.mxu0
        %v399 = vpop.f32.mrf.mxu0
        %v400 = vpop.f32.mrf.mxu0
        %401 = vdwg.mxu0
        %v402 = vpack.c.bf16 %v397, %v397
        %s403 = scalar_lea.vmem [#allocation7], 32
        %v404 = vld [vmem:[%s403] sm:$0xf]
        %v405 = vld [vmem:[%s403 + $0x4] sm:$0xf]
        %v406 = vld [vmem:[%s403 + $0x8] sm:$0xf]
        %v407 = vld [vmem:[%s403 + $0xc] sm:$0xf]
        %s408 = scalar_lea.vmem %s3, 2
        %v409 = vld [vmem:[%s408] sm:$0x1]
        %v411 = vlaneseq
        %v412 = vshrl.u32 %v411, 7
        %v413 = vsub.s32 0, %v412
        %v414 = vrot.slane %v409, %v413
        %v420 = vunpack.c.l.b16 %v404
        %v421 = vunpack.c.l.b16 %v405
        %v422 = vunpack.c.l.b16 %v406
        %v423 = vunpack.c.l.b16 %v407
        %v424 = vpack.c.b16 %v421, %v420
        %v425 = vpack.c.b16 %v423, %v422
        %v429 = vsel %vm292, %v268, 0
        %431 = vmatprep.subr.bf16.mxu0 0
        %432 = vmatpush1.bf16.msra.mxu0 0
        %433 = vmatprep.subr.bf16.mxu0 0
        %434 = vmatpush1.bf16.msra.mxu0 0
        %435 = vmatprep.subr.bf16.mxu0 0
        %436 = vmatpush1.bf16.msra.mxu0 0
        %437 = vmatprep.subr.bf16.mxu0 0
        %438 = vmatpush1.bf16.msra.mxu0 0
        %439 = vmatprep.subr.bf16.mxu0 0
        %440 = vmatpush1.bf16.msra.mxu0 0
        %441 = vmatprep.subr.bf16.mxu0 0
        %442 = vmatpush1.bf16.msra.mxu0 0
        %443 = vmatprep.subr.bf16.mxu0 0
        %444 = vmatpush1.bf16.msra.mxu0 %v425
        %445 = vmatprep.subr.bf16.mxu0 0
        %446 = vmatpush1.bf16.msra.mxu0 %v424
        %447 = vmatprep.subr.bf16.mxu0 0
        %448 = vmatpush2.bf16.msra.mxu0 0
        %449 = vmatprep.subr.bf16.mxu0 0
        %450 = vmatpush2.bf16.msra.mxu0 0
        %451 = vmatprep.subr.bf16.mxu0 0
        %452 = vmatpush2.bf16.msra.mxu0 0
        %453 = vmatprep.subr.bf16.mxu0 0
        %454 = vmatpush2.bf16.msra.mxu0 0
        %455 = vmatprep.subr.bf16.mxu0 0
        %456 = vmatpush2.bf16.msra.mxu0 0
        %457 = vmatprep.subr.bf16.mxu0 0
        %458 = vmatpush2.bf16.msra.mxu0 0
        %459 = vmatprep.subr.bf16.mxu0 0
        %460 = vmatpush2.bf16.msra.mxu0 0
        %461 = vmatprep.subr.bf16.mxu0 0
        %462 = vmatpush2.bf16.msra.mxu0 0
        %463 = vmatprep.mubr.bf16.mxu0 0
        %464 = vmatmul.mubr.bf16.gmra.mxu0 %v429
        %v465 = vpop.f32.mrf.mxu0
        %v466 = vadd.f32 %v414, %v465
        %v467 = vpop.f32.mrf.mxu0
        %v468 = vpop.f32.mrf.mxu0
        %v469 = vpop.f32.mrf.mxu0
        %470 = vdwg.mxu0
        %v471 = vpack.c.bf16 %v466, %v466
        %s472 = scalar_lea.vmem [#allocation7], 48
        %v473 = vld [vmem:[%s472] sm:$0xf]
        %v474 = vld [vmem:[%s472 + $0x4] sm:$0xf]
        %v475 = vld [vmem:[%s472 + $0x8] sm:$0xf]
        %v476 = vld [vmem:[%s472 + $0xc] sm:$0xf]
        %s477 = scalar_lea.vmem %s3, 3
        %v478 = vld [vmem:[%s477] sm:$0x1]
        %v480 = vlaneseq
        %v481 = vshrl.u32 %v480, 7
        %v482 = vsub.s32 0, %v481
        %v483 = vrot.slane %v478, %v482
        %v489 = vunpack.c.l.b16 %v473
        %v490 = vunpack.c.l.b16 %v474
        %v491 = vunpack.c.l.b16 %v475
        %v492 = vunpack.c.l.b16 %v476
        %v493 = vpack.c.b16 %v490, %v489
        %v494 = vpack.c.b16 %v492, %v491
        %497 = vmatprep.subr.bf16.mxu0 0
        %498 = vmatpush1.bf16.msra.mxu0 0
        %499 = vmatprep.subr.bf16.mxu0 0
        %500 = vmatpush1.bf16.msra.mxu0 0
        %501 = vmatprep.subr.bf16.mxu0 0
        %502 = vmatpush1.bf16.msra.mxu0 0
        %503 = vmatprep.subr.bf16.mxu0 0
        %504 = vmatpush1.bf16.msra.mxu0 0
        %505 = vmatprep.subr.bf16.mxu0 0
        %506 = vmatpush1.bf16.msra.mxu0 0
        %507 = vmatprep.subr.bf16.mxu0 0
        %508 = vmatpush1.bf16.msra.mxu0 0
        %509 = vmatprep.subr.bf16.mxu0 0
        %510 = vmatpush1.bf16.msra.mxu0 %v494
        %511 = vmatprep.subr.bf16.mxu0 0
        %512 = vmatpush1.bf16.msra.mxu0 %v493
        %513 = vmatprep.subr.bf16.mxu0 0
        %514 = vmatpush2.bf16.msra.mxu0 0
        %515 = vmatprep.subr.bf16.mxu0 0
        %516 = vmatpush2.bf16.msra.mxu0 0
        %517 = vmatprep.subr.bf16.mxu0 0
        %518 = vmatpush2.bf16.msra.mxu0 0
        %519 = vmatprep.subr.bf16.mxu0 0
        %520 = vmatpush2.bf16.msra.mxu0 0
        %521 = vmatprep.subr.bf16.mxu0 0
        %522 = vmatpush2.bf16.msra.mxu0 0
        %523 = vmatprep.subr.bf16.mxu0 0
        %524 = vmatpush2.bf16.msra.mxu0 0
        %525 = vmatprep.subr.bf16.mxu0 0
        %526 = vmatpush2.bf16.msra.mxu0 0
        %527 = vmatprep.subr.bf16.mxu0 0
        %528 = vmatpush2.bf16.msra.mxu0 0
        %529 = vmatprep.mubr.bf16.mxu0 0
        %530 = vmatmul.mubr.bf16.gmra.mxu0 %v429
        %v531 = vpop.f32.mrf.mxu0
        %v532 = vadd.f32 %v483, %v531
        %v533 = vpop.f32.mrf.mxu0
        %v534 = vpop.f32.mrf.mxu0
        %v535 = vpop.f32.mrf.mxu0
        %536 = vdwg.mxu0
        %v537 = vpack.c.bf16 %v532, %v532
        %v539 = vrot.slane %v537, 4
        %vm540 = vcmask 1043456
        %v543 = vsel %vm540, %v402, %v539
        %v545 = vrot.slane %v402, 4
        %v548 = vsel %vm540, %v537, %v545
        %v550 = vsel %vm292, %v336, 0
        %v552 = vsel %vm292, %v543, 0
        %554 = vmatprep.subr.bf16.mxu0 0
        %555 = vmatpush1.bf16.xpose.msra.mxu0 0
        %556 = vmatprep.subr.bf16.mxu0 0
        %557 = vmatpush1.bf16.xpose.msra.mxu0 0
        %558 = vmatprep.subr.bf16.mxu0 0
        %559 = vmatpush1.bf16.xpose.msra.mxu0 0
        %560 = vmatprep.subr.bf16.mxu0 0
        %561 = vmatpush1.bf16.xpose.msra.mxu0 0
        %562 = vmatprep.subr.bf16.mxu0 0
        %563 = vmatpush1.bf16.xpose.msra.mxu0 0
        %564 = vmatprep.subr.bf16.mxu0 0
        %565 = vmatpush1.bf16.xpose.msra.mxu0 0
        %566 = vmatprep.subr.bf16.mxu0 0
        %567 = vmatpush1.bf16.xpose.msra.mxu0 0
        %568 = vmatprep.subr.bf16.mxu0 0
        %569 = vmatpush1.bf16.xpose.msra.mxu0 %v552
        %570 = vmatprep.subr.bf16.mxu0 0
        %571 = vmatpush2.bf16.xpose.msra.mxu0 0
        %572 = vmatprep.subr.bf16.mxu0 0
        %573 = vmatpush2.bf16.xpose.msra.mxu0 0
        %574 = vmatprep.subr.bf16.mxu0 0
        %575 = vmatpush2.bf16.xpose.msra.mxu0 0
        %576 = vmatprep.subr.bf16.mxu0 0
        %577 = vmatpush2.bf16.xpose.msra.mxu0 0
        %578 = vmatprep.subr.bf16.mxu0 0
        %579 = vmatpush2.bf16.xpose.msra.mxu0 0
        %580 = vmatprep.subr.bf16.mxu0 0
        %581 = vmatpush2.bf16.xpose.msra.mxu0 0
        %582 = vmatprep.subr.bf16.mxu0 0
        %583 = vmatpush2.bf16.xpose.msra.mxu0 0
        %584 = vmatprep.subr.bf16.mxu0 0
        %585 = vmatpush2.bf16.xpose.msra.mxu0 0
        %586 = vmatprep.mubr.bf16.mxu0 0
        %587 = vmatmul.mubr.bf16.gmra.mxu0 %v550
        %v588 = vpop.f32.mrf.mxu0
        %v589 = vadd.f32 0.0, %v588
        %v590 = vpop.f32.mrf.mxu0
        %v591 = vpop.f32.mrf.mxu0
        %v592 = vpop.f32.mrf.mxu0
        %593 = vdwg.mxu0
        %v595 = vsel %vm292, %v471, 0
        %v597 = vsel %vm292, %v548, 0
        %599 = vmatprep.subr.bf16.mxu0 0
        %600 = vmatpush1.bf16.xpose.msra.mxu0 0
        %601 = vmatprep.subr.bf16.mxu0 0
        %602 = vmatpush1.bf16.xpose.msra.mxu0 0
        %603 = vmatprep.subr.bf16.mxu0 0
        %604 = vmatpush1.bf16.xpose.msra.mxu0 0
        %605 = vmatprep.subr.bf16.mxu0 0
        %606 = vmatpush1.bf16.xpose.msra.mxu0 0
        %607 = vmatprep.subr.bf16.mxu0 0
        %608 = vmatpush1.bf16.xpose.msra.mxu0 0
        %609 = vmatprep.subr.bf16.mxu0 0
        %610 = vmatpush1.bf16.xpose.msra.mxu0 0
        %611 = vmatprep.subr.bf16.mxu0 0
        %612 = vmatpush1.bf16.xpose.msra.mxu0 0
        %613 = vmatprep.subr.bf16.mxu0 0
        %614 = vmatpush1.bf16.xpose.msra.mxu0 %v597
        %615 = vmatprep.subr.bf16.mxu0 0
        %616 = vmatpush2.bf16.xpose.msra.mxu0 0
        %617 = vmatprep.subr.bf16.mxu0 0
        %618 = vmatpush2.bf16.xpose.msra.mxu0 0
        %619 = vmatprep.subr.bf16.mxu0 0
        %620 = vmatpush2.bf16.xpose.msra.mxu0 0
        %621 = vmatprep.subr.bf16.mxu0 0
        %622 = vmatpush2.bf16.xpose.msra.mxu0 0
        %623 = vmatprep.subr.bf16.mxu0 0
        %624 = vmatpush2.bf16.xpose.msra.mxu0 0
        %625 = vmatprep.subr.bf16.mxu0 0
        %626 = vmatpush2.bf16.xpose.msra.mxu0 0
        %627 = vmatprep.subr.bf16.mxu0 0
        %628 = vmatpush2.bf16.xpose.msra.mxu0 0
        %629 = vmatprep.subr.bf16.mxu0 0
        %630 = vmatpush2.bf16.xpose.msra.mxu0 0
        %631 = vmatprep.mubr.bf16.mxu0 0
        %632 = vmatmul.mubr.bf16.gmra.mxu0 %v595
        %v633 = vpop.f32.mrf.mxu0
        %v634 = vadd.f32 0.0, %v633
        %v635 = vpop.f32.mrf.mxu0
        %v636 = vpop.f32.mrf.mxu0
        %v637 = vpop.f32.mrf.mxu0
        %638 = vdwg.mxu0
        %v639 = vlaneseq
        %v640 = vand.u32 %v639, 127
        %vm641 = vcmp.lt.s32.totalorder %v640, 8
        %v642 = vsel %vm641, %v589, -1e+30
        %vm643 = vcmask 130048
        %v644 = vsel %vm643, %v642, -inf
        %645 = vmax.xlane.f32.xlu0 %v644
        %v646 = vpop.xlane.xlu0 %645
        %v647 = vsel %vm641, -1e+30, %v589
        %v648 = vsel %vm643, %v647, -inf
        %649 = vmax.xlane.f32.xlu0 %v648
        %v650 = vpop.xlane.xlu0 %649
        %v651 = vsel %vm641, %v646, %v650
        %v652 = vsub.f32 %v589, %v651
        %v653 = vmul.f32 %v652, 1.442695
        %v654 = vpow.pop %v653
        %v655 = vsel %vm641, %v654, 0.0
        %v656 = vsel %vm643, %v655, 0.0
        %657 = vadd.xlane.f32.xlu0 %v656
        %v658 = vpop.xlane.xlu0 %657
        %v659 = vsel %vm641, 0.0, %v654
        %v660 = vsel %vm643, %v659, 0.0
        %661 = vadd.xlane.f32.xlu0 %v660
        %v662 = vpop.xlane.xlu0 %661
        %v663 = vrcp.pop %v658
        %v664 = vrcp.pop %v662
        %v665 = vsel %vm641, %v663, %v664
        %v666 = vmul.f32 %v654, %v665
        %667 = vst.msk [vmem:[%s263] sm:$0xff] %vm643, %v666
        %v668 = vsel %vm641, %v634, -1e+30
        %v669 = vsel %vm643, %v668, -inf
        %670 = vmax.xlane.f32.xlu0 %v669
        %v671 = vpop.xlane.xlu0 %670
        %v672 = vsel %vm641, -1e+30, %v634
        %v673 = vsel %vm643, %v672, -inf
        %674 = vmax.xlane.f32.xlu0 %v673
        %v675 = vpop.xlane.xlu0 %674
        %v676 = vsel %vm641, %v671, %v675
        %v677 = vsub.f32 %v634, %v676
        %v678 = vmul.f32 %v677, 1.442695
        %v679 = vpow.pop %v678
        %v680 = vsel %vm641, %v679, 0.0
        %v681 = vsel %vm643, %v680, 0.0
        %682 = vadd.xlane.f32.xlu0 %v681
        %v683 = vpop.xlane.xlu0 %682
        %v684 = vsel %vm641, 0.0, %v679
        %v685 = vsel %vm643, %v684, 0.0
        %686 = vadd.xlane.f32.xlu0 %v685
        %v687 = vpop.xlane.xlu0 %686
        %v688 = vrcp.pop %v683
        %v689 = vrcp.pop %v687
        %v690 = vsel %vm641, %v688, %v689
        %v691 = vmul.f32 %v679, %v690
        %692 = vst.msk [vmem:[%s263 + $0x8] sm:$0xff] %vm643, %v691
        %s693 = sand.u32 %s126, 1
        %s694 = scalar_lea.sflag [#allocation4], %s693
        %s695 = sand.u32 %s126, 1
        %s696 = smul.addr %s695, 16
        %s697 = scalar_lea.vmem [#allocation8], %s696
        // Predicated region
        $region49: #{tpu_custom_call.1} parent=35 // pred_check
          %p698 = pneg %p136
        $region50: #{tpu_custom_call.1} parent=35 // pred_check_branch
          %700 = sbr.rel (%p698) target = $region52
        $region51: #{tpu_custom_call.1} parent=35 // pred_region
          %s702 = ssub.s32 256, 256
          %703 = vsyncadd %s694, %s702
          %s704 = smul.addr %s24, 2
          %s705 = smul.addr %s704, 128
          %s706 = scalar_lea.hbm %s4, %s705
          %s707 = sshll.u32 %s697, 4
          %s708 = int_to_ptr.vmem [resolvable:$true] %s707
          %713 = dma.vmem_to_hbm [thread:$0]  %s708, 256, %s706, %s694, 128, 128, 8
        $region52: #{tpu_custom_call.1} parent=35 // pred_fallthru
          _
      $region36: #{tpu_custom_call.1} parent=5 // pred_fallthru
        _
      %p714 = scmp.le.s32.totalorder 2, %s19
      // Predicated region
      $region53: #{tpu_custom_call.1} parent=5 // pred_check
        %p715 = pneg %p714
      $region54: #{tpu_custom_call.1} parent=5 // pred_check_branch
        %717 = sbr.rel (%p715) target = $region56
      $region55: #{tpu_custom_call.1} parent=5 // pred_region
        %s718 = ssub.s32 %s19, 2
        // Predicated region
        $region57: #{tpu_custom_call.1} parent=55 // pred_check
          %p719 = pneg %p142
        $region58: #{tpu_custom_call.1} parent=55 // pred_check_branch
          %721 = sbr.rel (%p719) target = $region60
        $region59: #{tpu_custom_call.1} parent=55 // pred_region
          %s722 = sand.u32 %s127, 1
          %s723 = scalar_lea.sflag [#allocation4], %s722
          %s724 = sand.u32 %s127, 1
          %s725 = smul.addr %s724, 16
          %s726 = scalar_lea.vmem [#allocation8], %s725
          %727 = dma.done %s723, 256
        $region60: #{tpu_custom_call.1} parent=55 // pred_fallthru
          _
      $region56: #{tpu_custom_call.1} parent=5 // pred_fallthru
        _
    $region6: #{tpu_custom_call.1} parent=1 // loop_footer
      %s23 = sadd.s32 1, %s19
    $region7: #{tpu_custom_call.1} parent=1 // loop_footer_branch
      %18 = sbr.rel target = $region3
    $region8: #{tpu_custom_call.1} parent=1 // loop_exit
      _
    %728 = vsyncpa [#allocation3], 1
    %s729 = scalar_lea.sflag [#allocation3], 1
    %730 = vsyncpa %s729, 1
    %731 = vsyncpa [#allocation6], 1
    %s732 = scalar_lea.sflag [#allocation6], 1
    %733 = vsyncpa %s732, 1
    %734 = vsyncpa [#allocation4], 1
    %s735 = scalar_lea.sflag [#allocation4], 1
    %736 = vsyncpa %s735, 1

</llo_original>
